<compile_context>
chip_gen: v5e
topology: v5e:2x2
jax: 0.10.0
libtpu: 0.0.40
codegen_flags: <defaults>
</compile_context>

<pallas_src>
import functools

import jax
import jax.numpy as jnp
from jax import lax
from jax.experimental import pallas as pl
from jax.experimental.pallas import tpu as pltpu


def _neg_logprobs(x, valid_rows):
    """-log_softmax(x, -1), with invalid (padded) rows forced finite."""
    x = jnp.where(valid_rows, x, 0.0)
    m = jnp.max(x, axis=-1, keepdims=True)
    shifted = x - m
    lse = jnp.log(jnp.sum(jnp.exp(shifted), axis=-1, keepdims=True))
    return lse - shifted  # == -logprobs, shape [tn, c]


def _ls_dense_kernel(x_ref, t_ref, out_ref, *, confidence, smoothing, n_rows):
    i = pl.program_id(0)
    tn, c = x_ref.shape

    @pl.when(i == 0)
    def _init():
        out_ref[0, 0] = 0.0

    rows = i * tn + lax.broadcasted_iota(jnp.int32, (tn, 1), 0)
    valid = rows < n_rows

    x = x_ref[...].astype(jnp.float32)
    t = t_ref[...].astype(jnp.float32)
    neg_lp = _neg_logprobs(x, valid)

    # confidence*nll + smoothing*smooth == sum(-logprobs * (confidence*t + smoothing/C), -1)
    w = confidence * t + (smoothing / c)
    loss_row = jnp.sum(neg_lp * w, axis=-1, keepdims=True)  # [tn, 1]
    loss_row = jnp.where(valid, loss_row, 0.0)
    out_ref[0, 0] += jnp.sum(loss_row)

    @pl.when(i == pl.num_programs(0) - 1)
    def _finalize():
        out_ref[0, 0] = out_ref[0, 0] * (1.0 / n_rows)


def _ls_labels_kernel(x_ref, lbl_ref, out_ref, *, confidence, smoothing, n_rows):
    i = pl.program_id(0)
    tn, c = x_ref.shape

    @pl.when(i == 0)
    def _init():
        out_ref[0, 0] = 0.0

    rows = i * tn + lax.broadcasted_iota(jnp.int32, (tn, 1), 0)
    valid = rows < n_rows

    x = x_ref[...].astype(jnp.float32)
    neg_lp = _neg_logprobs(x, valid)

    lbl = lbl_ref[...]                                   # [tn, 1] int32
    col = lax.broadcasted_iota(jnp.int32, (tn, c), 1)
    w = jnp.where(col == lbl, confidence + smoothing / c, smoothing / c)
    loss_row = jnp.sum(neg_lp * w, axis=-1, keepdims=True)
    loss_row = jnp.where(valid, loss_row, 0.0)
    out_ref[0, 0] += jnp.sum(loss_row)

    @pl.when(i == pl.num_programs(0) - 1)
    def _finalize():
        out_ref[0, 0] = out_ref[0, 0] * (1.0 / n_rows)


def _choose_block_rows(n, c, bytes_per_elem_total, block_rows):
    # Keep (2 inputs) x (2 pipeline buffers) x tile under ~8 MiB so the default
    # scoped VMEM works on every TPU generation without flag tweaks.
    budget = 8 * 1024 * 1024
    per_row = max(1, bytes_per_elem_total * c)
    max_rows = max(8, budget // (2 * per_row))
    tn = min(block_rows, max_rows)
    if n <= tn:
        return n              # full-dim block: no (8,) divisibility requirement
    return max(8, (tn // 8) * 8)


def label_smoothing_loss(x, target, smoothing=0.05, block_rows=512):
    """Faithful dense-target LabelSmoothing.forward (training mode)."""
    confidence = 1.0 - smoothing
    n, c = x.shape
    assert target.shape == (n, c)

    tn = _choose_block_rows(n, c, x.dtype.itemsize + target.dtype.itemsize, block_rows)
    grid = (pl.cdiv(n, tn),)

    kernel = functools.partial(
        _ls_dense_kernel, confidence=float(confidence),
        smoothing=float(smoothing), n_rows=n)

    out = pl.pallas_call(
        kernel,
        out_shape=jax.ShapeDtypeStruct((1, 1), jnp.float32),
        grid_spec=pltpu.PrefetchScalarGridSpec(
            num_scalar_prefetch=0,
            grid=grid,
            in_specs=[
                pl.BlockSpec((tn, c), lambda i: (i, 0)),
                pl.BlockSpec((tn, c), lambda i: (i, 0)),
            ],
            out_specs=pl.BlockSpec(memory_space=pltpu.MemorySpace.SMEM),
        ),
        compiler_params=pltpu.CompilerParams(
            dimension_semantics=("arbitrary",),
        ),
    )(x, target)
    return out[0, 0]


def label_smoothing_loss_from_labels(x, labels, smoothing=0.05, block_rows=512):
    """Fast path for integer class labels: skips the dense one-hot target DMA."""
    confidence = 1.0 - smoothing
    n, c = x.shape
    labels2d = labels.astype(jnp.int32).reshape(n, 1)

    tn = _choose_block_rows(n, c, x.dtype.itemsize, block_rows)
    grid = (pl.cdiv(n, tn),)

    kernel = functools.partial(
        _ls_labels_kernel, confidence=float(confidence),
        smoothing=float(smoothing), n_rows=n)

    out = pl.pallas_call(
        kernel,
        out_shape=jax.ShapeDtypeStruct((1, 1), jnp.float32),
        grid_spec=pltpu.PrefetchScalarGridSpec(
            num_scalar_prefetch=0,
            grid=grid,
            in_specs=[
                pl.BlockSpec((tn, c), lambda i: (i, 0)),
                pl.BlockSpec((tn, 1), lambda i: (i, 0)),
            ],
            out_specs=pl.BlockSpec(memory_space=pltpu.MemorySpace.SMEM),
        ),
        compiler_params=pltpu.CompilerParams(
            dimension_semantics=("arbitrary",),
        ),
    )(x, labels2d)
    return out[0, 0]


def _reference(x, target, smoothing=0.05):
    confidence = 1.0 - smoothing
    x = x.astype(jnp.float32)
    target = target.astype(jnp.float32)
    logprobs = jax.nn.log_softmax(x, axis=-1)
    nll_loss = jnp.sum(-logprobs * target, axis=-1)
    smooth_loss = jnp.mean(-logprobs, axis=-1)
    loss = confidence * nll_loss + smoothing * smooth_loss
    return jnp.mean(loss)


if __name__ == "__main__":
    key = jax.random.PRNGKey(0)
    k1, k2, k3, k4 = jax.random.split(key, 4)

    # Small case matching the ALASKA2 script (ResNet34 logits, num_classes=4).
    batch, num_classes = 8, 4
    x = jax.random.normal(k1, (batch, num_classes), dtype=jnp.float32)
    labels = jax.random.randint(k2, (batch,), 0, num_classes)
    target = jax.nn.one_hot(labels, num_classes, dtype=jnp.float32)
    ref = _reference(x, target, smoothing=0.05)

    loss = jax.block_until_ready(label_smoothing_loss(x, target, smoothing=0.05))
    assert jnp.allclose(loss, ref, atol=1e-5, rtol=1e-5), (loss, ref)

    loss_lbl = jax.block_until_ready(
        label_smoothing_loss_from_labels(x, labels, smoothing=0.05))
    assert jnp.allclose(loss_lbl, ref, atol=1e-5, rtol=1e-5), (loss_lbl, ref)

    # Larger, ragged case exercising the multi-tile accumulation + row masking.
    n2, c2 = 1000, 4
    x2 = jax.random.normal(k3, (n2, c2), dtype=jnp.float32)
    labels2 = jax.random.randint(k4, (n2,), 0, c2)
    target2 = jax.nn.one_hot(labels2, c2, dtype=jnp.float32)
    ref2 = _reference(x2, target2, smoothing=0.05)

    loss2 = jax.block_until_ready(
        label_smoothing_loss(x2, target2, smoothing=0.05, block_rows=256))
    assert jnp.allclose(loss2, ref2, atol=1e-5, rtol=1e-4), (loss2, ref2)

    loss2_lbl = jax.block_until_ready(
        label_smoothing_loss_from_labels(x2, labels2, smoothing=0.05, block_rows=256))
    assert jnp.allclose(loss2_lbl, ref2, atol=1e-5, rtol=1e-4), (loss2_lbl, ref2)

    print("KERNEL_OK")
</pallas_src>

<mosaic_0001>
module attributes {stable_mosaic.version = 11 : i64} {
  func.func @_ls_dense_kernel(%arg0: i32, %arg1: memref<8x4xf32, #tpu.memory_space<vmem>>, %arg2: memref<8x4xf32, #tpu.memory_space<vmem>>, %arg3: memref<1x1xf32, #tpu.memory_space<smem>>) attributes {dimension_semantics = [#tpu.dimension_semantics<arbitrary>], iteration_bounds = array<i64: 1>, scalar_prefetch = 0 : i64, scratch_operands = 0 : i64, tpu.core_type = #tpu.core_type<tc>, window_params = [{transform_indices = @transform_0, window_bounds = array<i64: 8, 4>}, {transform_indices = @transform_1, window_bounds = array<i64: 8, 4>}, {transform_indices = @transform_2, window_bounds = array<i64: 1, 1>}]} {
    %c0_i32 = arith.constant 0 : i32
    %0 = arith.cmpi eq, %arg0, %c0_i32 : i32
    %1 = arith.extui %0 : i1 to i32
    %c0_i32_0 = arith.constant 0 : i32
    %2 = arith.cmpi ne, %1, %c0_i32_0 : i32
    scf.if %2 {
      %cst_18 = arith.constant 0.000000e+00 : f32
      %c0_19 = arith.constant 0 : index
      %c0_20 = arith.constant 0 : index
      %44 = memref.load %arg3[%c0_19, %c0_20] : memref<1x1xf32, #tpu.memory_space<smem>>
      memref.store %cst_18, %arg3[%c0_19, %c0_20] : memref<1x1xf32, #tpu.memory_space<smem>>
    } else {
    }
    %c8_i32 = arith.constant 8 : i32
    %3 = arith.muli %arg0, %c8_i32 : i32
    %4 = tpu.iota {dimensions = array<i32: 0>} : vector<8x1xi32>
    %5 = vector.broadcast %3 : i32 to vector<8x1xi32>
    %6 = arith.addi %5, %4 : vector<8x1xi32>
    %c8_i32_1 = arith.constant 8 : i32
    %7 = vector.broadcast %c8_i32_1 : i32 to vector<8x1xi32>
    %8 = arith.cmpi slt, %6, %7 : vector<8x1xi32>
    %c0 = arith.constant 0 : index
    %c0_2 = arith.constant 0 : index
    %9 = vector.load %arg1[%c0, %c0_2] : memref<8x4xf32, #tpu.memory_space<vmem>>, vector<8x4xf32>
    %c0_3 = arith.constant 0 : index
    %c0_4 = arith.constant 0 : index
    %10 = vector.load %arg2[%c0_3, %c0_4] : memref<8x4xf32, #tpu.memory_space<vmem>>, vector<8x4xf32>
    %cst = arith.constant 0.000000e+00 : f32
    %11 = vector.shape_cast %8 : vector<8x1xi1> to vector<8x1xi1>
    %12 = vector.broadcast %11 : vector<8x1xi1> to vector<8x4xi1>
    %13 = vector.broadcast %cst : f32 to vector<8x4xf32>
    %14 = arith.select %12, %9, %13 : vector<8x4xi1>, vector<8x4xf32>
    %cst_5 = arith.constant dense<0xFF800000> : vector<8xf32>
    %15 = vector.multi_reduction <maximumf>, %14, %cst_5 [1] : vector<8x4xf32> to vector<8xf32>
    %16 = vector.shape_cast %15 : vector<8xf32> to vector<8x1xf32>
    %17 = vector.broadcast %16 : vector<8x1xf32> to vector<8x4xf32>
    %18 = arith.subf %14, %17 : vector<8x4xf32>
    %19 = math.exp %18 : vector<8x4xf32>
    %cst_6 = arith.constant dense<0.000000e+00> : vector<8xf32>
    %20 = vector.multi_reduction <add>, %19, %cst_6 [1] : vector<8x4xf32> to vector<8xf32>
    %21 = vector.shape_cast %20 : vector<8xf32> to vector<8x1xf32>
    %22 = math.log %21 : vector<8x1xf32>
    %23 = vector.broadcast %22 : vector<8x1xf32> to vector<8x4xf32>
    %24 = arith.subf %23, %18 : vector<8x4xf32>
    %cst_7 = arith.constant 0.949999988 : f32
    %25 = vector.broadcast %cst_7 : f32 to vector<8x4xf32>
    %26 = arith.mulf %25, %10 : vector<8x4xf32>
    %cst_8 = arith.constant 1.250000e-02 : f32
    %27 = vector.broadcast %cst_8 : f32 to vector<8x4xf32>
    %28 = arith.addf %26, %27 : vector<8x4xf32>
    %29 = arith.mulf %24, %28 : vector<8x4xf32>
    %cst_9 = arith.constant dense<0.000000e+00> : vector<8xf32>
    %30 = vector.multi_reduction <add>, %29, %cst_9 [1] : vector<8x4xf32> to vector<8xf32>
    %31 = vector.shape_cast %30 : vector<8xf32> to vector<8x1xf32>
    %cst_10 = arith.constant 0.000000e+00 : f32
    %32 = vector.broadcast %cst_10 : f32 to vector<8x1xf32>
    %33 = arith.select %8, %31, %32 : vector<8x1xi1>, vector<8x1xf32>
    %c0_11 = arith.constant 0 : index
    %c0_12 = arith.constant 0 : index
    %34 = memref.load %arg3[%c0_11, %c0_12] : memref<1x1xf32, #tpu.memory_space<smem>>
    %35 = vector.shape_cast %33 : vector<8x1xf32> to vector<1x8x1xf32>
    %cst_13 = arith.constant dense<0.000000e+00> : vector<1xf32>
    %36 = vector.multi_reduction <add>, %35, %cst_13 [1, 2] : vector<1x8x1xf32> to vector<1xf32>
    %37 = vector.shape_cast %36 : vector<1xf32> to vector<1x1x1xf32>
    %38 = vector.extract %37[0, 0, 0] : f32 from vector<1x1x1xf32>
    %39 = arith.addf %34, %38 : f32
    %c0_14 = arith.constant 0 : index
    %c0_15 = arith.constant 0 : index
    %40 = memref.load %arg3[%c0_14, %c0_15] : memref<1x1xf32, #tpu.memory_space<smem>>
    memref.store %39, %arg3[%c0_14, %c0_15] : memref<1x1xf32, #tpu.memory_space<smem>>
    %c0_i32_16 = arith.constant 0 : i32
    %41 = arith.cmpi eq, %arg0, %c0_i32_16 : i32
    %42 = arith.extui %41 : i1 to i32
    %c0_i32_17 = arith.constant 0 : i32
    %43 = arith.cmpi ne, %42, %c0_i32_17 : i32
    scf.if %43 {
      %c0_18 = arith.constant 0 : index
      %c0_19 = arith.constant 0 : index
      %44 = memref.load %arg3[%c0_18, %c0_19] : memref<1x1xf32, #tpu.memory_space<smem>>
      %cst_20 = arith.constant 1.250000e-01 : f32
      %45 = arith.mulf %44, %cst_20 : f32
      %c0_21 = arith.constant 0 : index
      %c0_22 = arith.constant 0 : index
      %46 = memref.load %arg3[%c0_21, %c0_22] : memref<1x1xf32, #tpu.memory_space<smem>>
      memref.store %45, %arg3[%c0_21, %c0_22] : memref<1x1xf32, #tpu.memory_space<smem>>
    } else {
    }
    return
  }
  func.func @transform_0(%arg0: i32) -> (i32, i32) {
    %c0_i32 = arith.constant 0 : i32
    %c0_i32_0 = arith.constant 0 : i32
    return %arg0, %c0_i32 : i32, i32
  }
  func.func @transform_1(%arg0: i32) -> (i32, i32) {
    %c0_i32 = arith.constant 0 : i32
    %c0_i32_0 = arith.constant 0 : i32
    return %arg0, %c0_i32 : i32, i32
  }
  func.func @transform_2(%arg0: i32) -> (i32, i32) {
    %c0_i32 = arith.constant 0 : i32
    %c0_i32_0 = arith.constant 0 : i32
    %c0_i32_1 = arith.constant 0 : i32
    return %c0_i32, %c0_i32_0 : i32, i32
  }
}

</mosaic_0001>

<llo_original>
// kernel: tpu_custom_call.1
$region0: #{tpu_custom_call.1}
  #allocation0 [shape = 'u32[]', space=smem, size = 0x4, offset = 0x4, fixed_abs, tag = 'smem constant byte address 0x4 - core index']
  #allocation1 [shape = 'u32[72,128]{1,0:T(1,128)}', space=vmem, size = 0x9000, scoped, tag = 'internal scratch']
  %s0 = inlined_call_operand.vmem [shape: f32[8,4], index: 0, kind: input, shape index: {}]
  %s1 = inlined_call_operand.vmem [shape: f32[8,4], index: 1, kind: input, shape index: {}]
  %s2 = inlined_call_operand.hbm [shape: f32[1,1], index: 2, kind: output, shape index: {}]
  %s3 = sld [smem:[#allocation0]]
  $region26: #{tpu_custom_call.1} parent=0
    _
  %s5 = ssub.s32 1, %s3
  %s6 = scalar_select 0, %s5, %s3
  $region1: #{tpu_custom_call.1} parent=0
    #allocation2 [shape = 'u8[512]{0}', space=smem, size = 0x200, scoped, tag = 'output window, operand 0, single buffered']
    #allocation3 [shape = 's32[1]{0}', space=sflag, size = 0x4, scoped, tag = 'scoped memory for tpu_custom_call.1']
    %7 = vsyncpa [#allocation3], 0
    // Predicated region
    $region2: #{tpu_custom_call.1} parent=1 // pred_check
      _
    $region3: #{tpu_custom_call.1} parent=1 // pred_check_branch
      %9 = sbr.rel (0) target = $region5
    $region4: #{tpu_custom_call.1} parent=1 // pred_region
      _
    $region5: #{tpu_custom_call.1} parent=1 // pred_fallthru
      _
    // Predicated region
    $region6: #{tpu_custom_call.1} parent=1 // pred_check
      _
    $region7: #{tpu_custom_call.1} parent=1 // pred_check_branch
      %11 = sbr.rel (0) target = $region9
    $region8: #{tpu_custom_call.1} parent=1 // pred_region
      _
    $region9: #{tpu_custom_call.1} parent=1 // pred_fallthru
      _
    %p12 = scmp.eq.s32.totalorder 0, 0
    // Predicated region
    $region10: #{tpu_custom_call.1} parent=1 // pred_check
      %p13 = pneg %p12
    $region11: #{tpu_custom_call.1} parent=1 // pred_check_branch
      %15 = sbr.rel (%p13) target = $region13
    $region12: #{tpu_custom_call.1} parent=1 // pred_region
      %s16 = scalar_lea.smem [#allocation2], 0
      %17 = sst [smem:[%s16]] 0.0
    $region13: #{tpu_custom_call.1} parent=1 // pred_fallthru
      _
    %s18 = smul.u32 0, 8
    %v19 = vlaneseq
    %v20 = vshrl.u32 %v19, 7
    %v21 = vstv %s18
    %v22 = vadd.s32 %v21, %v20
    %vm23 = vcmp.lt.s32.totalorder %v22, 8
    %v24 = vld [vmem:[%s0] sm:$0xff]
    %v25 = vld [vmem:[%s1] sm:$0xff]
    %v26 = vsel %vm23, 1, 0
    %vm27 = vcmp.eq.s32.totalorder %v26, 1
    %v28 = vsel %vm27, %v24, 0.0
    %vm29 = vcmask 31744
    %v30 = vsel %vm29, %v28, -inf
    %31 = vmax.xlane.f32.xlu0 %v30
    %v32 = vpop.xlane.xlu0 %31
    %v33 = vsub.f32 %v28, %v32
    %v34 = vmul.f32 %v33, 1.442695
    %v35 = vpow.pop %v34
    %v36 = vsel %vm29, %v35, 0.0
    %37 = vadd.xlane.f32.xlu0 %v36
    %v38 = vpop.xlane.xlu0 %37
    %v39 = vlog2.pop %v38
    %v40 = vmul.f32 %v39, 0.6931472
    %v41 = vsub.f32 %v40, %v33
    %v42 = vmul.f32 %v25, 0.95
    %v43 = vadd.f32 %v42, 0.0125
    %v44 = vmul.f32 %v41, %v43
    %v45 = vsel %vm29, %v44, 0.0
    %46 = vadd.xlane.f32.xlu0 %v45
    %v47 = vpop.xlane.xlu0 %46
    %v48 = vsel %vm23, %v47, 0.0
    %s49 = sld [smem:[#allocation2]]
    %vm50 = vcmask 7168
    %v51 = vsel %vm50, %v48, 0.0
    %52 = vadd.xlane.f32.xlu0 %v51
    %v53 = vpop.xlane.xlu0 %52
    %v54 = vrot.slane %v53, 4
    %v55 = vadd.f32 %v53, %v54
    %v56 = vrot.slane %v55, 2
    %v57 = vadd.f32 %v55, %v56
    %v58 = vrot.slane %v57, 1
    %v59 = vadd.f32 %v57, %v58
    %s60 = vtos %v59
    %s61 = sadd.f32 %s49, %s60
    %s62 = scalar_lea.smem [#allocation2], 0
    %63 = sst [smem:[%s62]] %s61
    // Predicated region
    $region14: #{tpu_custom_call.1} parent=1 // pred_check
      %p64 = pneg %p12
    $region15: #{tpu_custom_call.1} parent=1 // pred_check_branch
      %66 = sbr.rel (%p64) target = $region17
    $region16: #{tpu_custom_call.1} parent=1 // pred_region
      %s67 = sld [smem:[#allocation2]]
      %s68 = smul.f32 %s67, 0.125
      %69 = sst [smem:[%s62]] %s68
    $region17: #{tpu_custom_call.1} parent=1 // pred_fallthru
      _
    // Predicated region
    $region18: #{tpu_custom_call.1} parent=1 // pred_check
      _
    $region19: #{tpu_custom_call.1} parent=1 // pred_check_branch
      %71 = sbr.rel (0) target = $region21
    $region20: #{tpu_custom_call.1} parent=1 // pred_region
      %73 = vsyncadd [#allocation3], 0
      %s75 = sshll.u32 %s2, 4
      %s76 = int_to_ptr.hbm [resolvable:$true] %s75
      %78 = dma.smem_to_hbm [#allocation2], 16, %s76, [#allocation3]
    $region21: #{tpu_custom_call.1} parent=1 // pred_fallthru
      _
    // Predicated region
    $region22: #{tpu_custom_call.1} parent=1 // pred_check
      _
    $region23: #{tpu_custom_call.1} parent=1 // pred_check_branch
      %80 = sbr.rel (0) target = $region25
    $region24: #{tpu_custom_call.1} parent=1 // pred_region
      %82 = dma.done [#allocation3], 16
    $region25: #{tpu_custom_call.1} parent=1 // pred_fallthru
      _
    %83 = sfence
    %84 = vsyncpa [#allocation3], 1

</llo_original>
